<compile_context>
chip_gen: v6e
topology: v6e:2x2x1
jax: 0.10.0
libtpu: 0.0.40
codegen_flags: <defaults>
</compile_context>

<pallas_src>
import functools

import jax
import jax.numpy as jnp
from jax.experimental import pallas as pl
from jax.experimental.pallas import tpu as pltpu


def _round_up(x, m):
    return (x + m - 1) // m * m


# ----------------------------- Pallas kernels ------------------------------ #

def _tconv_stats_kernel(w_ref, x_ref, sum_ref, sumsq_ref):
    """Pass 1: column tile of Y^T = W^T @ X^T, reduced to BN partial stats.

    w_ref:     (CKKs, Cin)  resident weight slab (tiny, constant index map)
    x_ref:     (Cin, TM)    lane tile of X^T (lane-dense load)
    sum_ref:   (CKKs, 1)    per-row sums over the TM columns of this tile
    sumsq_ref: (CKKs, 1)    per-row sums of squares
    """
    y = jnp.dot(w_ref[...], x_ref[...], preferred_element_type=jnp.float32)
    sum_ref[...] = jnp.sum(y, axis=1, keepdims=True)        # lane reduce (XLU)
    sumsq_ref[...] = jnp.sum(y * y, axis=1, keepdims=True)


def _tconv_bn_act_kernel(w_ref, x_ref, scale_ref, shift_ref, o_ref, *,
                         neg_slope):
    """Pass 2: recompute the matmul, fused affine BatchNorm + LeakyReLU.

    w_ref:     (CKKs, Cin)   resident weight slab
    x_ref:     (Cin, TM)     lane tile of X^T
    scale_ref: (CKKs, 1)     per-row BN scale (gamma * rsqrt(var + eps))
    shift_ref: (CKKs, 1)     per-row BN shift (beta - mean * scale)
    o_ref:     (CKKs, TM)    activation tile of Y^T (lane-dense store)
    """
    y = jnp.dot(w_ref[...], x_ref[...], preferred_element_type=jnp.float32)
    z = y * scale_ref[...] + shift_ref[...]
    o_ref[...] = jnp.where(z > 0, z, neg_slope * z)


# ------------------------------ Python wrapper ------------------------------ #

def transpose_conv_block(x, w, gamma, beta, *, kernel_size, stride,
                         eps=1e-3, neg_slope=0.1, shortcut=False):
    """Forward pass of TransposeConvBlock.

    x:     (N, Cin, H, W)        float32, NCHW
    w:     (Cin, Cout, k, k)     float32, PyTorch ConvTranspose2d weight layout
    gamma: (Cout,)  beta: (Cout,)
    """
    assert kernel_size == stride, "only the non-overlapping k == s, p == 0 case"
    N, Cin, H, W = x.shape
    Cin_w, Cout, kh, kw = w.shape
    assert Cin_w == Cin and kh == kw == kernel_size
    Hout, Wout = H * stride, W * stride

    M = N * H * W
    CKK = Cout * kh * kw
    CKKs = _round_up(CKK, 8)                 # sublane-aligned rows of Y^T
    TM = min(2048, _round_up(M, 128))        # lane tile (full 128-lane stores)
    Mpad = _round_up(M, TM)
    n_tiles = Mpad // TM

    # X^T (Cin, M) and W^T (CKK, Cin); zero-pad M to the lane-tile multiple.
    x2dT = jnp.transpose(x, (1, 0, 2, 3)).reshape(Cin, M)
    if Mpad != M:
        x2dT = jnp.pad(x2dT, ((0, 0), (0, Mpad - M)))
    w2dT = jnp.transpose(w.reshape(Cin, CKK))            # (CKK, Cin)
    if CKKs != CKK:
        w2dT = jnp.pad(w2dT, ((0, CKKs - CKK), (0, 0)))

    # ---- pass 1: matmul + per-tile BN partial statistics (no y writeback) --
    flops1 = int(2 * CKKs * Cin * Mpad + 3 * CKKs * Mpad)
    bytes1 = int(4 * (Cin * Mpad + CKKs * Cin + 2 * n_tiles * CKKs))
    sums, sumsqs = pl.pallas_call(
        _tconv_stats_kernel,
        out_shape=(jax.ShapeDtypeStruct((n_tiles * CKKs, 1), jnp.float32),
                   jax.ShapeDtypeStruct((n_tiles * CKKs, 1), jnp.float32)),
        grid=(n_tiles,),
        in_specs=[
            pl.BlockSpec((CKKs, Cin), lambda i: (0, 0)),   # resident weights
            pl.BlockSpec((Cin, TM), lambda i: (0, i)),
        ],
        out_specs=(pl.BlockSpec((CKKs, 1), lambda i: (i, 0)),
                   pl.BlockSpec((CKKs, 1), lambda i: (i, 0))),
        compiler_params=pltpu.CompilerParams(
            dimension_semantics=("parallel",),
            vmem_limit_bytes=32 * 1024 * 1024),
        cost_estimate=pl.CostEstimate(flops=flops1, transcendentals=0,
                                      bytes_accessed=bytes1),
    )(w2dT, x2dT)

    # ---- tiny cross-tile + k*k fold of the BN statistics (plain JAX) -------
    col_sum = jnp.sum(sums.reshape(n_tiles, CKKs)[:, :CKK], axis=0)      # (CKK,)
    col_sumsq = jnp.sum(sumsqs.reshape(n_tiles, CKKs)[:, :CKK], axis=0)  # (CKK,)
    count = M * kh * kw                                   # == N * Hout * Wout
    ch_sum = col_sum.reshape(Cout, kh * kw).sum(axis=1)   # (Cout,)
    ch_sumsq = col_sumsq.reshape(Cout, kh * kw).sum(axis=1)
    mean = ch_sum / count
    var = jnp.maximum(ch_sumsq / count - mean * mean, 0.0)   # biased variance
    inv = gamma * jax.lax.rsqrt(var + eps)
    scale_row = jnp.broadcast_to(inv[:, None], (Cout, kh * kw)).reshape(CKK)
    shift_row = jnp.broadcast_to((beta - mean * inv)[:, None],
                                 (Cout, kh * kw)).reshape(CKK)
    if CKKs != CKK:
        scale_row = jnp.pad(scale_row, (0, CKKs - CKK))
        shift_row = jnp.pad(shift_row, (0, CKKs - CKK))
    scale_row = scale_row.reshape(CKKs, 1)
    shift_row = shift_row.reshape(CKKs, 1)

    # ---- pass 2: recomputed matmul fused with affine BN + LeakyReLU --------
    flops2 = int(2 * CKKs * Cin * Mpad + 3 * CKKs * Mpad)
    bytes2 = int(4 * (Cin * Mpad + CKKs * Cin + 2 * CKKs + CKKs * Mpad))
    out2dT = pl.pallas_call(
        functools.partial(_tconv_bn_act_kernel, neg_slope=neg_slope),
        out_shape=jax.ShapeDtypeStruct((CKKs, Mpad), jnp.float32),
        grid=(n_tiles,),
        in_specs=[
            pl.BlockSpec((CKKs, Cin), lambda i: (0, 0)),   # resident weights
            pl.BlockSpec((Cin, TM), lambda i: (0, i)),
            pl.BlockSpec((CKKs, 1), lambda i: (0, 0)),     # resident scale
            pl.BlockSpec((CKKs, 1), lambda i: (0, 0)),     # resident shift
        ],
        out_specs=pl.BlockSpec((CKKs, TM), lambda i: (0, i)),
        compiler_params=pltpu.CompilerParams(
            dimension_semantics=("parallel",),
            vmem_limit_bytes=32 * 1024 * 1024),
        cost_estimate=pl.CostEstimate(flops=flops2, transcendentals=0,
                                      bytes_accessed=bytes2),
    )(w2dT, x2dT, scale_row, shift_row)

    # ---- single NCHW scatter (pure transpose), done once in XLA -------------
    out = (out2dT[:CKK, :M]
           .reshape(Cout, kh, kw, N, H, W)
           .transpose(3, 0, 4, 1, 5, 2)
           .reshape(N, Cout, Hout, Wout))

    if shortcut:
        # NOTE: mirrors the PyTorch module's `inputs + act(bn(conv(inputs)))`;
        # only shape-compatible when Cin == Cout and the spatial size is kept.
        out = x + out
    return out


# --------------------------- pure-JAX reference ----------------------------- #

def _reference(x, w, gamma, beta, *, eps, neg_slope, shortcut):
    N, Cin, H, W = x.shape
    _, Cout, kh, kw = w.shape
    y = jnp.einsum('nchw,coab->nohawb', x, w).reshape(N, Cout, H * kh, W * kw)
    mean = jnp.mean(y, axis=(0, 2, 3), keepdims=True)
    var = jnp.mean(y * y, axis=(0, 2, 3), keepdims=True) - mean * mean
    z = (y - mean) * jax.lax.rsqrt(var + eps)
    z = z * gamma.reshape(1, Cout, 1, 1) + beta.reshape(1, Cout, 1, 1)
    out = jnp.where(z > 0, z, neg_slope * z)
    return x + out if shortcut else out


# ----------------------------------- main ----------------------------------- #

if __name__ == "__main__":
    key = jax.random.PRNGKey(0)
    k_x, k_w, k_g, k_b = jax.random.split(key, 4)

    # module config: input_channels=8, output_channels=4, kernel_size=2,
    # stride=2, padding=0, act='leaky', shortcut=False
    N, Cin, H, W = 2, 8, 16, 16
    Cout, ksz, stride = 4, 2, 2

    x = jax.random.normal(k_x, (N, Cin, H, W), dtype=jnp.float32)
    w = jax.random.normal(k_w, (Cin, Cout, ksz, ksz), dtype=jnp.float32) * 0.1
    gamma = 1.0 + 0.1 * jax.random.normal(k_g, (Cout,), dtype=jnp.float32)
    beta = 0.1 * jax.random.normal(k_b, (Cout,), dtype=jnp.float32)

    out = transpose_conv_block(x, w, gamma, beta,
                               kernel_size=ksz, stride=stride,
                               eps=1e-3, neg_slope=0.1, shortcut=False)
    out = jax.block_until_ready(out)

    ref = _reference(x, w, gamma, beta, eps=1e-3, neg_slope=0.1, shortcut=False)
    assert out.shape == (N, Cout, H * stride, W * stride), out.shape
    max_err = float(jnp.max(jnp.abs(out - ref)))
    assert jnp.allclose(out, ref, rtol=1e-3, atol=1e-3), max_err

    print("KERNEL_OK")
</pallas_src>

<mosaic_0001>
module attributes {stable_mosaic.version = 11 : i64} {
  func.func @_tconv_stats_kernel(%arg0: i32, %arg1: memref<16x8xf32, #tpu.memory_space<vmem>>, %arg2: memref<8x512xf32, #tpu.memory_space<vmem>>, %arg3: memref<16x1xf32, #tpu.memory_space<vmem>>, %arg4: memref<16x1xf32, #tpu.memory_space<vmem>>) attributes {dimension_semantics = [#tpu.dimension_semantics<parallel>], iteration_bounds = array<i64: 1>, scalar_prefetch = 0 : i64, scratch_operands = 0 : i64, tpu.core_type = #tpu.core_type<tc>, window_params = [{pipeline_mode = #tpu.pipeline_mode<synchronous>, transform_indices = @transform_0, window_bounds = array<i64: 16, 8>}, {transform_indices = @transform_1, window_bounds = array<i64: 8, 512>}, {transform_indices = @transform_2, window_bounds = array<i64: 16, 1>}, {transform_indices = @transform_3, window_bounds = array<i64: 16, 1>}]} {
    %c0 = arith.constant 0 : index
    %c0_0 = arith.constant 0 : index
    %0 = vector.load %arg1[%c0, %c0_0] : memref<16x8xf32, #tpu.memory_space<vmem>>, vector<16x8xf32>
    %c0_1 = arith.constant 0 : index
    %c0_2 = arith.constant 0 : index
    %1 = vector.load %arg2[%c0_1, %c0_2] : memref<8x512xf32, #tpu.memory_space<vmem>>, vector<8x512xf32>
    %cst = arith.constant dense<0.000000e+00> : vector<16x512xf32>
    %2 = tpu.matmul %0, %1, %cst {dimension_numbers = #tpu.dot_dimension_numbers<[1], [0], [0], [1], [0, 0, 1, 1], [], []>} : vector<16x8xf32>, vector<8x512xf32>, vector<16x512xf32> -> vector<16x512xf32>
    %cst_3 = arith.constant dense<0.000000e+00> : vector<16xf32>
    %3 = vector.multi_reduction <add>, %2, %cst_3 [1] : vector<16x512xf32> to vector<16xf32>
    %4 = vector.shape_cast %3 : vector<16xf32> to vector<16x1xf32>
    %c0_4 = arith.constant 0 : index
    %c0_5 = arith.constant 0 : index
    %5 = vector.load %arg3[%c0_4, %c0_5] : memref<16x1xf32, #tpu.memory_space<vmem>>, vector<16x1xf32>
    tpu.vector_store %arg3[%c0_4, %c0_5], %4 {strides = array<i32>} : memref<16x1xf32, #tpu.memory_space<vmem>>, vector<16x1xf32>,
    %6 = arith.mulf %2, %2 : vector<16x512xf32>
    %cst_6 = arith.constant dense<0.000000e+00> : vector<16xf32>
    %7 = vector.multi_reduction <add>, %6, %cst_6 [1] : vector<16x512xf32> to vector<16xf32>
    %8 = vector.shape_cast %7 : vector<16xf32> to vector<16x1xf32>
    %c0_7 = arith.constant 0 : index
    %c0_8 = arith.constant 0 : index
    %9 = vector.load %arg4[%c0_7, %c0_8] : memref<16x1xf32, #tpu.memory_space<vmem>>, vector<16x1xf32>
    tpu.vector_store %arg4[%c0_7, %c0_8], %8 {strides = array<i32>} : memref<16x1xf32, #tpu.memory_space<vmem>>, vector<16x1xf32>,
    return
  }
  func.func @transform_0(%arg0: i32) -> (i32, i32) {
    %c0_i32 = arith.constant 0 : i32
    %c0_i32_0 = arith.constant 0 : i32
    %c0_i32_1 = arith.constant 0 : i32
    return %c0_i32, %c0_i32_0 : i32, i32
  }
  func.func @transform_1(%arg0: i32) -> (i32, i32) {
    %c0_i32 = arith.constant 0 : i32
    %c0_i32_0 = arith.constant 0 : i32
    return %c0_i32, %arg0 : i32, i32
  }
  func.func @transform_2(%arg0: i32) -> (i32, i32) {
    %c0_i32 = arith.constant 0 : i32
    %c0_i32_0 = arith.constant 0 : i32
    return %arg0, %c0_i32 : i32, i32
  }
  func.func @transform_3(%arg0: i32) -> (i32, i32) {
    %c0_i32 = arith.constant 0 : i32
    %c0_i32_0 = arith.constant 0 : i32
    return %arg0, %c0_i32 : i32, i32
  }
}

</mosaic_0001>

<llo_original>
// kernel: tpu_custom_call.1
$region0: #{tpu_custom_call.1}
  #allocation0 [shape = 'u32[]', space=smem, size = 0x4, offset = 0x4, fixed_abs, tag = 'smem constant byte address 0x4 - core index']
  #allocation1 [shape = 'u32[144,128]{1,0:T(1,128)}', space=vmem, size = 0x12000, scoped, tag = 'internal scratch']
  %s0 = inlined_call_operand.vmem [shape: f32[16,8], index: 0, kind: input, shape index: {}]
  %s1 = inlined_call_operand.hbm [shape: f32[8,512], index: 1, kind: input, shape index: {}]
  %s2 = inlined_call_operand.vmem [shape: f32[16,1], index: 2, kind: output, shape index: {0}]
  %s3 = inlined_call_operand.vmem [shape: f32[16,1], index: 3, kind: output, shape index: {1}]
  %4 = xla_tuple %s2, %s3
  %s5 = sld [smem:[#allocation0]]
  $region30: #{tpu_custom_call.1} parent=0
    _
  %s7 = ssub.s32 1, %s5
  %s8 = scalar_select 0, %s7, %s5
  $region1: #{tpu_custom_call.1} parent=0
    #allocation2 [shape = 'u8[16384]{0}', space=vmem, size = 0x4000, scoped, tag = 'input window, operand 1, single buffered']
    #allocation3 [shape = 's32[1]{0}', space=sflag, size = 0x4, scoped, tag = 'scoped memory for tpu_custom_call.1']
    %9 = vsyncpa [#allocation3], 0
    // Predicated region
    $region2: #{tpu_custom_call.1} parent=1 // pred_check
      _
    $region3: #{tpu_custom_call.1} parent=1 // pred_check_branch
      %11 = sbr.rel (0) target = $region5
    $region4: #{tpu_custom_call.1} parent=1 // pred_region
      _
    $region5: #{tpu_custom_call.1} parent=1 // pred_fallthru
      _
    // Predicated region
    $region6: #{tpu_custom_call.1} parent=1 // pred_check
      _
    $region7: #{tpu_custom_call.1} parent=1 // pred_check_branch
      %13 = sbr.rel (0) target = $region9
    $region8: #{tpu_custom_call.1} parent=1 // pred_region
      %s15 = ssub.s32 512, 512
      %16 = vsyncadd [#allocation3], %s15
      %s18 = sshll.u32 [#allocation2], 4
      %s19 = int_to_ptr.vmem [resolvable:$true] %s18
      %21 = dma.hbm_to_vmem [thread:$0]  %s1, 512, %s19, [#allocation3]
    $region9: #{tpu_custom_call.1} parent=1 // pred_fallthru
      _
    // Predicated region
    $region10: #{tpu_custom_call.1} parent=1 // pred_check
      _
    $region11: #{tpu_custom_call.1} parent=1 // pred_check_branch
      %23 = sbr.rel (0) target = $region13
    $region12: #{tpu_custom_call.1} parent=1 // pred_region
      %24 = dma.done [#allocation3], 512
    $region13: #{tpu_custom_call.1} parent=1 // pred_fallthru
      _
    %v25 = vld [vmem:[%s0] sm:$0xff]
    %v26 = vld [vmem:[%s0 + $0x8] sm:$0xff]
    %v27 = vld [vmem:[#allocation2] sm:$0xff]
    %v28 = vld [vmem:[#allocation2 + $0x8] sm:$0xff]
    %v29 = vld [vmem:[#allocation2 + $0x10] sm:$0xff]
    %v30 = vld [vmem:[#allocation2 + $0x18] sm:$0xff]
    %vm31 = vcmask 64512
    %v33 = vsel %vm31, %v25, 0
    %v36 = vsel %vm31, %v26, 0
    %38 = vmatprep.subr.mxu0 0.0
    %39 = vmatpush1.msra.mxu0 0.0
    %40 = vmatprep.subr.mxu0 0.0
    %41 = vmatpush1.msra.mxu0 0.0
    %42 = vmatprep.subr.mxu0 0.0
    %43 = vmatpush1.msra.mxu0 0.0
    %44 = vmatprep.subr.mxu0 0.0
    %45 = vmatpush1.msra.mxu0 0.0
    %46 = vmatprep.subr.mxu0 0.0
    %47 = vmatpush1.msra.mxu0 0.0
    %48 = vmatprep.subr.mxu0 0.0
    %49 = vmatpush1.msra.mxu0 0.0
    %50 = vmatprep.subr.mxu0 0.0
    %51 = vmatpush1.msra.mxu0 0.0
    %52 = vmatprep.subr.mxu0 0.0
    %53 = vmatpush1.msra.mxu0 0.0
    %54 = vmatprep.subr.mxu0 0.0
    %55 = vmatpush1.msra.mxu0 0.0
    %56 = vmatprep.subr.mxu0 0.0
    %57 = vmatpush1.msra.mxu0 0.0
    %58 = vmatprep.subr.mxu0 0.0
    %59 = vmatpush1.msra.mxu0 0.0
    %60 = vmatprep.subr.mxu0 0.0
    %61 = vmatpush1.msra.mxu0 0.0
    %62 = vmatprep.subr.mxu0 0.0
    %63 = vmatpush1.msra.mxu0 0.0
    %64 = vmatprep.subr.mxu0 0.0
    %65 = vmatpush1.msra.mxu0 0.0
    %66 = vmatprep.subr.mxu0 0.0
    %67 = vmatpush1.msra.mxu0 0.0
    %68 = vmatprep.subr.mxu0 %v28
    %69 = vmatpush1.msra.mxu0 %v27
    %70 = vmatprep.subr.mxu0 0.0
    %71 = vmatpush2.msra.mxu0 0.0
    %72 = vmatprep.subr.mxu0 0.0
    %73 = vmatpush2.msra.mxu0 0.0
    %74 = vmatprep.subr.mxu0 0.0
    %75 = vmatpush2.msra.mxu0 0.0
    %76 = vmatprep.subr.mxu0 0.0
    %77 = vmatpush2.msra.mxu0 0.0
    %78 = vmatprep.subr.mxu0 0.0
    %79 = vmatpush2.msra.mxu0 0.0
    %80 = vmatprep.subr.mxu0 0.0
    %81 = vmatpush2.msra.mxu0 0.0
    %82 = vmatprep.subr.mxu0 0.0
    %83 = vmatpush2.msra.mxu0 0.0
    %84 = vmatprep.subr.mxu0 0.0
    %85 = vmatpush2.msra.mxu0 0.0
    %86 = vmatprep.subr.mxu0 0.0
    %87 = vmatpush2.msra.mxu0 0.0
    %88 = vmatprep.subr.mxu0 0.0
    %89 = vmatpush2.msra.mxu0 0.0
    %90 = vmatprep.subr.mxu0 0.0
    %91 = vmatpush2.msra.mxu0 0.0
    %92 = vmatprep.subr.mxu0 0.0
    %93 = vmatpush2.msra.mxu0 0.0
    %94 = vmatprep.subr.mxu0 0.0
    %95 = vmatpush2.msra.mxu0 0.0
    %96 = vmatprep.subr.mxu0 0.0
    %97 = vmatpush2.msra.mxu0 0.0
    %98 = vmatprep.subr.mxu0 0.0
    %99 = vmatpush2.msra.mxu0 0.0
    %100 = vmatprep.subr.mxu0 0.0
    %101 = vmatpush2.msra.mxu0 0.0
    %102 = vmatprep.mubr.f32.mxu0 0.0
    %103 = vmatmul.mubr.f32.gmra.mxu0 %v33
    %v104 = vpop.f32.mrf.mxu0
    %v105 = vadd.f32 0.0, %v104
    %v106 = vpop.f32.mrf.mxu0
    %v107 = vadd.f32 0.0, %v106
    %108 = vmatprep.mubr.f32.mxu0 0.0
    %109 = vmatmul.mubr.f32.gmra.mxu0 %v36
    %v110 = vpop.f32.mrf.mxu0
    %v111 = vadd.f32 0.0, %v110
    %v112 = vpop.f32.mrf.mxu0
    %v113 = vadd.f32 0.0, %v112
    %114 = vdwg.mxu0
    %115 = vmatprep.subr.mxu0 0.0
    %116 = vmatpush1.msra.mxu0 0.0
    %117 = vmatprep.subr.mxu0 0.0
    %118 = vmatpush1.msra.mxu0 0.0
    %119 = vmatprep.subr.mxu0 0.0
    %120 = vmatpush1.msra.mxu0 0.0
    %121 = vmatprep.subr.mxu0 0.0
    %122 = vmatpush1.msra.mxu0 0.0
    %123 = vmatprep.subr.mxu0 0.0
    %124 = vmatpush1.msra.mxu0 0.0
    %125 = vmatprep.subr.mxu0 0.0
    %126 = vmatpush1.msra.mxu0 0.0
    %127 = vmatprep.subr.mxu0 0.0
    %128 = vmatpush1.msra.mxu0 0.0
    %129 = vmatprep.subr.mxu0 0.0
    %130 = vmatpush1.msra.mxu0 0.0
    %131 = vmatprep.subr.mxu0 0.0
    %132 = vmatpush1.msra.mxu0 0.0
    %133 = vmatprep.subr.mxu0 0.0
    %134 = vmatpush1.msra.mxu0 0.0
    %135 = vmatprep.subr.mxu0 0.0
    %136 = vmatpush1.msra.mxu0 0.0
    %137 = vmatprep.subr.mxu0 0.0
    %138 = vmatpush1.msra.mxu0 0.0
    %139 = vmatprep.subr.mxu0 0.0
    %140 = vmatpush1.msra.mxu0 0.0
    %141 = vmatprep.subr.mxu0 0.0
    %142 = vmatpush1.msra.mxu0 0.0
    %143 = vmatprep.subr.mxu0 0.0
    %144 = vmatpush1.msra.mxu0 0.0
    %145 = vmatprep.subr.mxu0 %v30
    %146 = vmatpush1.msra.mxu0 %v29
    %147 = vmatprep.subr.mxu0 0.0
    %148 = vmatpush2.msra.mxu0 0.0
    %149 = vmatprep.subr.mxu0 0.0
    %150 = vmatpush2.msra.mxu0 0.0
    %151 = vmatprep.subr.mxu0 0.0
    %152 = vmatpush2.msra.mxu0 0.0
    %153 = vmatprep.subr.mxu0 0.0
    %154 = vmatpush2.msra.mxu0 0.0
    %155 = vmatprep.subr.mxu0 0.0
    %156 = vmatpush2.msra.mxu0 0.0
    %157 = vmatprep.subr.mxu0 0.0
    %158 = vmatpush2.msra.mxu0 0.0
    %159 = vmatprep.subr.mxu0 0.0
    %160 = vmatpush2.msra.mxu0 0.0
    %161 = vmatprep.subr.mxu0 0.0
    %162 = vmatpush2.msra.mxu0 0.0
    %163 = vmatprep.subr.mxu0 0.0
    %164 = vmatpush2.msra.mxu0 0.0
    %165 = vmatprep.subr.mxu0 0.0
    %166 = vmatpush2.msra.mxu0 0.0
    %167 = vmatprep.subr.mxu0 0.0
    %168 = vmatpush2.msra.mxu0 0.0
    %169 = vmatprep.subr.mxu0 0.0
    %170 = vmatpush2.msra.mxu0 0.0
    %171 = vmatprep.subr.mxu0 0.0
    %172 = vmatpush2.msra.mxu0 0.0
    %173 = vmatprep.subr.mxu0 0.0
    %174 = vmatpush2.msra.mxu0 0.0
    %175 = vmatprep.subr.mxu0 0.0
    %176 = vmatpush2.msra.mxu0 0.0
    %177 = vmatprep.subr.mxu0 0.0
    %178 = vmatpush2.msra.mxu0 0.0
    %179 = vmatprep.mubr.f32.mxu0 0.0
    %180 = vmatmul.mubr.f32.gmra.mxu0 %v33
    %v181 = vpop.f32.mrf.mxu0
    %v182 = vadd.f32 0.0, %v181
    %v183 = vpop.f32.mrf.mxu0
    %v184 = vadd.f32 0.0, %v183
    %185 = vmatprep.mubr.f32.mxu0 0.0
    %186 = vmatmul.mubr.f32.gmra.mxu0 %v36
    %v187 = vpop.f32.mrf.mxu0
    %v188 = vadd.f32 0.0, %v187
    %v189 = vpop.f32.mrf.mxu0
    %v190 = vadd.f32 0.0, %v189
    %191 = vdwg.mxu0
    %v192 = vadd.f32 %v105, %v107
    %v193 = vadd.f32 %v192, %v182
    %v194 = vadd.f32 %v193, %v184
    %195 = vadd.xlane.f32.xlu0 %v194
    %v196 = vpop.xlane.xlu0 %195
    %v197 = vadd.f32 %v111, %v113
    %v198 = vadd.f32 %v197, %v188
    %v199 = vadd.f32 %v198, %v190
    %200 = vadd.xlane.f32.xlu0 %v199
    %v201 = vpop.xlane.xlu0 %200
    %vm202 = vcmask 7168
    %203 = vst.msk [vmem:[%s2] sm:$0xff] %vm202, %v196
    %204 = vst.msk [vmem:[%s2 + $0x8] sm:$0xff] %vm202, %v201
    %v205 = vmul.f32 %v105, %v105
    %v206 = vmul.f32 %v107, %v107
    %v207 = vmul.f32 %v182, %v182
    %v208 = vmul.f32 %v184, %v184
    %v209 = vmul.f32 %v111, %v111
    %v210 = vmul.f32 %v113, %v113
    %v211 = vmul.f32 %v188, %v188
    %v212 = vmul.f32 %v190, %v190
    %v213 = vadd.f32 %v205, %v206
    %v214 = vadd.f32 %v213, %v207
    %v215 = vadd.f32 %v214, %v208
    %216 = vadd.xlane.f32.xlu0 %v215
    %v217 = vpop.xlane.xlu0 %216
    %v218 = vadd.f32 %v209, %v210
    %v219 = vadd.f32 %v218, %v211
    %v220 = vadd.f32 %v219, %v212
    %221 = vadd.xlane.f32.xlu0 %v220
    %v222 = vpop.xlane.xlu0 %221
    %223 = vst.msk [vmem:[%s3] sm:$0xff] %vm202, %v217
    %224 = vst.msk [vmem:[%s3 + $0x8] sm:$0xff] %vm202, %v222
    // Predicated region
    $region14: #{tpu_custom_call.1} parent=1 // pred_check
      _
    $region15: #{tpu_custom_call.1} parent=1 // pred_check_branch
      %226 = sbr.rel (0) target = $region17
    $region16: #{tpu_custom_call.1} parent=1 // pred_region
      _
    $region17: #{tpu_custom_call.1} parent=1 // pred_fallthru
      _
    // Predicated region
    $region18: #{tpu_custom_call.1} parent=1 // pred_check
      _
    $region19: #{tpu_custom_call.1} parent=1 // pred_check_branch
      %228 = sbr.rel (0) target = $region21
    $region20: #{tpu_custom_call.1} parent=1 // pred_region
      _
    $region21: #{tpu_custom_call.1} parent=1 // pred_fallthru
      _
    // Predicated region
    $region22: #{tpu_custom_call.1} parent=1 // pred_check
      _
    $region23: #{tpu_custom_call.1} parent=1 // pred_check_branch
      %230 = sbr.rel (0) target = $region25
    $region24: #{tpu_custom_call.1} parent=1 // pred_region
      _
    $region25: #{tpu_custom_call.1} parent=1 // pred_fallthru
      _
    // Predicated region
    $region26: #{tpu_custom_call.1} parent=1 // pred_check
      _
    $region27: #{tpu_custom_call.1} parent=1 // pred_check_branch
      %232 = sbr.rel (0) target = $region29
    $region28: #{tpu_custom_call.1} parent=1 // pred_region
      _
    $region29: #{tpu_custom_call.1} parent=1 // pred_fallthru
      _
    %233 = vsyncpa [#allocation3], 1

</llo_original>
